<compile_context>
chip_gen: v7x
topology: tpu7x:2x2x1
jax: 0.10.0
libtpu: 0.0.40
codegen_flags: <defaults>
</compile_context>

<pallas_src>
import functools

import jax
import jax.numpy as jnp
from jax.experimental import pallas as pl
from jax.experimental.pallas import tpu as pltpu


def _round_up(x, m):
    return ((x + m - 1) // m) * m


# ----------------------------------------------------------------------------
# Fused MLP kernel: x -> [Linear (+ReLU)] * (L-1) -> Linear
# refs layout: x_ref, (w_ref, b_ref) * num_layers, o_ref
# ----------------------------------------------------------------------------
def _make_mlp_kernel(num_layers, mxu_dtype):
    def kernel(*refs):
        x_ref = refs[0]
        o_ref = refs[-1]

        h = x_ref[...]  # (TR, K) float32
        for i in range(num_layers):
            w_ref = refs[1 + 2 * i]   # (K_i, F_i), already mxu_dtype
            b_ref = refs[2 + 2 * i]   # (1, F_i), float32
            acc = jnp.dot(
                h.astype(mxu_dtype),
                w_ref[...],
                preferred_element_type=jnp.float32,
            )                          # MXU, f32 accumulate
            h = acc + b_ref[...]       # VPU bias add (broadcast over rows)
            if i < num_layers - 1:
                h = jnp.maximum(h, 0.0)  # fused ReLU
        o_ref[...] = h.astype(o_ref.dtype)

    return kernel


def mlp_forward_pallas(x2d, weights, biases, *, mxu_dtype=jnp.bfloat16,
                       row_tile=None):
    """x2d: (R, input_dim) f32; weights[i]: (K_i, F_i); biases[i]: (F_i,)."""
    R, K = x2d.shape
    num_layers = len(weights)
    F_out = weights[-1].shape[1]

    # Row tile: big enough to amortize per-step overhead, small enough to give
    # >= 2 grid steps (so both v7x TensorCores / megacore get work), and a
    # multiple of 8 (sublane constraint).
    if row_tile is None:
        row_tile = min(512, _round_up(max(8, -(-R // 2)), 8))
    R_pad = _round_up(R, row_tile)
    if R_pad != R:
        x2d = jnp.pad(x2d, ((0, R_pad - R), (0, 0)))
    grid = (R_pad // row_tile,)

    in_specs = [pl.BlockSpec((row_tile, K), lambda i: (i, 0))]
    inputs = [x2d]
    for w, b in zip(weights, biases):
        kin, kout = w.shape
        # Weights cast to bf16 once here (halves weight DMA, bf16 MXU path).
        inputs.append(w.astype(mxu_dtype))
        inputs.append(b.reshape(1, kout).astype(jnp.float32))
        in_specs.append(pl.BlockSpec((kin, kout), lambda i: (0, 0)))
        in_specs.append(pl.BlockSpec((1, kout), lambda i: (0, 0)))

    out = pl.pallas_call(
        _make_mlp_kernel(num_layers, mxu_dtype),
        out_shape=jax.ShapeDtypeStruct((R_pad, F_out), jnp.float32),
        grid=grid,
        in_specs=in_specs,
        out_specs=pl.BlockSpec((row_tile, F_out), lambda i: (i, 0)),
        compiler_params=pltpu.CompilerParams(
            dimension_semantics=("parallel",),
        ),
    )(*inputs)
    return out[:R]


# ----------------------------------------------------------------------------
# Module wrapper mirroring the PyTorch MLP
# ----------------------------------------------------------------------------
class MLPPallas:
    """Very simple multi-layer perceptron (FFN): Linear+ReLU x (L-1), then Linear."""

    def __init__(self, input_dim, hidden_dim, output_dim, num_layers, key=None,
                 mxu_dtype=jnp.bfloat16):
        self.num_layers = num_layers
        self.mxu_dtype = mxu_dtype
        h = [hidden_dim] * (num_layers - 1)
        dims_in = [input_dim] + h
        dims_out = h + [output_dim]

        if key is None:
            key = jax.random.PRNGKey(42)
        keys = jax.random.split(key, 2 * num_layers)

        self.weights, self.biases = [], []
        for li, (n_in, n_out) in enumerate(zip(dims_in, dims_out)):
            kw, kb = keys[2 * li], keys[2 * li + 1]
            # uniform(-1/sqrt(fan_in), 1/sqrt(fan_in)) like torch.nn.Linear default
            bound = 1.0 / (n_in ** 0.5)
            w = jax.random.uniform(kw, (n_in, n_out), jnp.float32, -bound, bound)
            b = jax.random.uniform(kb, (n_out,), jnp.float32, -bound, bound)
            self.weights.append(w)
            self.biases.append(b)

    def __call__(self, x):
        """x: (..., input_dim) -> (..., output_dim)."""
        lead = x.shape[:-1]
        K = x.shape[-1]
        x2d = x.reshape(-1, K)
        out = mlp_forward_pallas(x2d, self.weights, self.biases,
                                 mxu_dtype=self.mxu_dtype)
        return out.reshape(*lead, out.shape[-1])

    def reference(self, x):
        """Pure-JAX f32 reference (matches the PyTorch forward)."""
        h = x
        for i, (w, b) in enumerate(zip(self.weights, self.biases)):
            h = jnp.dot(h, w) + b
            if i < self.num_layers - 1:
                h = jnp.maximum(h, 0.0)
        return h


# ----------------------------------------------------------------------------
if __name__ == "__main__":
    key = jax.random.PRNGKey(0)
    k_x, k_params = jax.random.split(key, 2)

    # Small shapes consistent with the DETR bbox-head MLP usage: (batch, seq, C)
    batch, seq = 2, 8
    input_dim, hidden_dim, output_dim, num_layers = 32, 32, 4, 3

    x = jax.random.normal(k_x, (batch, seq, input_dim), jnp.float32)

    mlp = MLPPallas(input_dim, hidden_dim, output_dim, num_layers, key=k_params)

    out = mlp(x)
    out = jax.block_until_ready(out)

    assert out.shape == (batch, seq, output_dim)
    assert bool(jnp.all(jnp.isfinite(out)))

    # Correctness vs pure-JAX f32 reference (tolerance covers bf16 MXU operands).
    ref = mlp.reference(x)
    err = float(jnp.max(jnp.abs(out - ref)))
    assert err < 5e-2, f"max abs error {err} too large"

    print("KERNEL_OK")
</pallas_src>

<mosaic_0001>
module attributes {stable_mosaic.version = 11 : i64} {
  func.func @kernel(%arg0: i32, %arg1: memref<8x32xf32, #tpu.memory_space<vmem>>, %arg2: memref<32x32xbf16, #tpu.memory_space<vmem>>, %arg3: memref<1x32xf32, #tpu.memory_space<vmem>>, %arg4: memref<32x32xbf16, #tpu.memory_space<vmem>>, %arg5: memref<1x32xf32, #tpu.memory_space<vmem>>, %arg6: memref<32x4xbf16, #tpu.memory_space<vmem>>, %arg7: memref<1x4xf32, #tpu.memory_space<vmem>>, %arg8: memref<8x4xf32, #tpu.memory_space<vmem>>) attributes {dimension_semantics = [#tpu.dimension_semantics<parallel>], iteration_bounds = array<i64: 2>, scalar_prefetch = 0 : i64, scratch_operands = 0 : i64, tpu.core_type = #tpu.core_type<tc>, window_params = [{transform_indices = @transform_0, window_bounds = array<i64: 8, 32>}, {pipeline_mode = #tpu.pipeline_mode<synchronous>, transform_indices = @transform_1, window_bounds = array<i64: 32, 32>}, {pipeline_mode = #tpu.pipeline_mode<synchronous>, transform_indices = @transform_2, window_bounds = array<i64: 1, 32>}, {pipeline_mode = #tpu.pipeline_mode<synchronous>, transform_indices = @transform_3, window_bounds = array<i64: 32, 32>}, {pipeline_mode = #tpu.pipeline_mode<synchronous>, transform_indices = @transform_4, window_bounds = array<i64: 1, 32>}, {pipeline_mode = #tpu.pipeline_mode<synchronous>, transform_indices = @transform_5, window_bounds = array<i64: 32, 4>}, {pipeline_mode = #tpu.pipeline_mode<synchronous>, transform_indices = @transform_6, window_bounds = array<i64: 1, 4>}, {transform_indices = @transform_7, window_bounds = array<i64: 8, 4>}]} {
    %c0 = arith.constant 0 : index
    %c0_0 = arith.constant 0 : index
    %0 = vector.load %arg1[%c0, %c0_0] : memref<8x32xf32, #tpu.memory_space<vmem>>, vector<8x32xf32>
    %1 = arith.truncf %0 : vector<8x32xf32> to vector<8x32xbf16>
    %c0_1 = arith.constant 0 : index
    %c0_2 = arith.constant 0 : index
    %2 = vector.load %arg2[%c0_1, %c0_2] : memref<32x32xbf16, #tpu.memory_space<vmem>>, vector<32x32xbf16>
    %cst = arith.constant dense<0.000000e+00> : vector<8x32xf32>
    %3 = tpu.matmul %1, %2, %cst {dimension_numbers = #tpu.dot_dimension_numbers<[1], [0], [0], [1], [0, 0, 1, 1], [], []>} : vector<8x32xbf16>, vector<32x32xbf16>, vector<8x32xf32> -> vector<8x32xf32>
    %c0_3 = arith.constant 0 : index
    %c0_4 = arith.constant 0 : index
    %4 = vector.load %arg3[%c0_3, %c0_4] : memref<1x32xf32, #tpu.memory_space<vmem>>, vector<1x32xf32>
    %5 = vector.broadcast %4 : vector<1x32xf32> to vector<8x32xf32>
    %6 = arith.addf %3, %5 : vector<8x32xf32>
    %cst_5 = arith.constant 0.000000e+00 : f32
    %7 = vector.broadcast %cst_5 : f32 to vector<8x32xf32>
    %8 = arith.maximumf %6, %7 : vector<8x32xf32>
    %9 = arith.truncf %8 : vector<8x32xf32> to vector<8x32xbf16>
    %c0_6 = arith.constant 0 : index
    %c0_7 = arith.constant 0 : index
    %10 = vector.load %arg4[%c0_6, %c0_7] : memref<32x32xbf16, #tpu.memory_space<vmem>>, vector<32x32xbf16>
    %cst_8 = arith.constant dense<0.000000e+00> : vector<8x32xf32>
    %11 = tpu.matmul %9, %10, %cst_8 {dimension_numbers = #tpu.dot_dimension_numbers<[1], [0], [0], [1], [0, 0, 1, 1], [], []>} : vector<8x32xbf16>, vector<32x32xbf16>, vector<8x32xf32> -> vector<8x32xf32>
    %c0_9 = arith.constant 0 : index
    %c0_10 = arith.constant 0 : index
    %12 = vector.load %arg5[%c0_9, %c0_10] : memref<1x32xf32, #tpu.memory_space<vmem>>, vector<1x32xf32>
    %13 = vector.broadcast %12 : vector<1x32xf32> to vector<8x32xf32>
    %14 = arith.addf %11, %13 : vector<8x32xf32>
    %cst_11 = arith.constant 0.000000e+00 : f32
    %15 = vector.broadcast %cst_11 : f32 to vector<8x32xf32>
    %16 = arith.maximumf %14, %15 : vector<8x32xf32>
    %17 = arith.truncf %16 : vector<8x32xf32> to vector<8x32xbf16>
    %c0_12 = arith.constant 0 : index
    %c0_13 = arith.constant 0 : index
    %18 = vector.load %arg6[%c0_12, %c0_13] : memref<32x4xbf16, #tpu.memory_space<vmem>>, vector<32x4xbf16>
    %cst_14 = arith.constant dense<0.000000e+00> : vector<8x4xf32>
    %19 = tpu.matmul %17, %18, %cst_14 {dimension_numbers = #tpu.dot_dimension_numbers<[1], [0], [0], [1], [0, 0, 1, 1], [], []>} : vector<8x32xbf16>, vector<32x4xbf16>, vector<8x4xf32> -> vector<8x4xf32>
    %c0_15 = arith.constant 0 : index
    %c0_16 = arith.constant 0 : index
    %20 = vector.load %arg7[%c0_15, %c0_16] : memref<1x4xf32, #tpu.memory_space<vmem>>, vector<1x4xf32>
    %21 = vector.broadcast %20 : vector<1x4xf32> to vector<8x4xf32>
    %22 = arith.addf %19, %21 : vector<8x4xf32>
    %c0_17 = arith.constant 0 : index
    %c0_18 = arith.constant 0 : index
    %23 = vector.load %arg8[%c0_17, %c0_18] : memref<8x4xf32, #tpu.memory_space<vmem>>, vector<8x4xf32>
    tpu.vector_store %arg8[%c0_17, %c0_18], %22 {strides = array<i32>} : memref<8x4xf32, #tpu.memory_space<vmem>>, vector<8x4xf32>,
    return
  }
  func.func @transform_0(%arg0: i32) -> (i32, i32) {
    %c0_i32 = arith.constant 0 : i32
    %c0_i32_0 = arith.constant 0 : i32
    return %arg0, %c0_i32 : i32, i32
  }
  func.func @transform_1(%arg0: i32) -> (i32, i32) {
    %c0_i32 = arith.constant 0 : i32
    %c0_i32_0 = arith.constant 0 : i32
    %c0_i32_1 = arith.constant 0 : i32
    return %c0_i32, %c0_i32_0 : i32, i32
  }
  func.func @transform_2(%arg0: i32) -> (i32, i32) {
    %c0_i32 = arith.constant 0 : i32
    %c0_i32_0 = arith.constant 0 : i32
    %c0_i32_1 = arith.constant 0 : i32
    return %c0_i32, %c0_i32_0 : i32, i32
  }
  func.func @transform_3(%arg0: i32) -> (i32, i32) {
    %c0_i32 = arith.constant 0 : i32
    %c0_i32_0 = arith.constant 0 : i32
    %c0_i32_1 = arith.constant 0 : i32
    return %c0_i32, %c0_i32_0 : i32, i32
  }
  func.func @transform_4(%arg0: i32) -> (i32, i32) {
    %c0_i32 = arith.constant 0 : i32
    %c0_i32_0 = arith.constant 0 : i32
    %c0_i32_1 = arith.constant 0 : i32
    return %c0_i32, %c0_i32_0 : i32, i32
  }
  func.func @transform_5(%arg0: i32) -> (i32, i32) {
    %c0_i32 = arith.constant 0 : i32
    %c0_i32_0 = arith.constant 0 : i32
    %c0_i32_1 = arith.constant 0 : i32
    return %c0_i32, %c0_i32_0 : i32, i32
  }
  func.func @transform_6(%arg0: i32) -> (i32, i32) {
    %c0_i32 = arith.constant 0 : i32
    %c0_i32_0 = arith.constant 0 : i32
    %c0_i32_1 = arith.constant 0 : i32
    return %c0_i32, %c0_i32_0 : i32, i32
  }
  func.func @transform_7(%arg0: i32) -> (i32, i32) {
    %c0_i32 = arith.constant 0 : i32
    %c0_i32_0 = arith.constant 0 : i32
    return %arg0, %c0_i32 : i32, i32
  }
}

</mosaic_0001>

<llo_original>
// kernel: tpu_custom_call.1
$region0: #{tpu_custom_call.1}
  #allocation0 [shape = 'u32[]', space=smem, size = 0x4, offset = 0x4, fixed_abs, tag = 'smem constant byte address 0x4 - core index']
  #allocation1 [shape = 'u32[144,128]{1,0:T(1,128)}', space=vmem, size = 0x12000, scoped, tag = 'internal scratch']
  %s0 = inlined_call_operand.vmem [shape: f32[16,32], index: 0, kind: input, shape index: {}]
  %s1 = inlined_call_operand.hbm [shape: bf16[32,32], index: 1, kind: input, shape index: {}]
  %s2 = inlined_call_operand.vmem [shape: f32[1,32], index: 2, kind: input, shape index: {}]
  %s3 = inlined_call_operand.hbm [shape: bf16[32,32], index: 3, kind: input, shape index: {}]
  %s4 = inlined_call_operand.vmem [shape: f32[1,32], index: 4, kind: input, shape index: {}]
  %s5 = inlined_call_operand.vmem [shape: bf16[32,4], index: 5, kind: input, shape index: {}]
  %s6 = inlined_call_operand.vmem [shape: f32[1,4], index: 6, kind: input, shape index: {}]
  %s7 = inlined_call_operand.vmem [shape: f32[16,4], index: 7, kind: output, shape index: {}]
  %s8 = sld [smem:[#allocation0]]
  $region69: #{tpu_custom_call.1} parent=0
    _
  %s10 = ssub.s32 1, %s8
  %s11 = scalar_select 0, %s10, %s8
  $region1: #{tpu_custom_call.1} parent=0
    #allocation2 [shape = 'u8[8192]{0}', space=vmem, size = 0x2000, scoped, tag = 'input window, operand 1, single buffered']
    #allocation3 [shape = 's32[2]{0}', space=sflag, size = 0x8, scoped, tag = 'scoped memory for tpu_custom_call.1']
    #allocation4 [shape = 'u8[8192]{0}', space=vmem, size = 0x2000, scoped, tag = 'input window, operand 3, single buffered']
    #allocation5 [shape = 's32[1]{0}', space=sflag, size = 0x4, scoped, tag = 'scoped memory for tpu_custom_call.1']
    %12 = vsyncpa [#allocation3], 0
    %13 = vsyncpa [#allocation5], 0
    loop: start=0, step=1, limit=4
    $region2: #{tpu_custom_call.1} parent=1 // loop_pre_header
      _
    $region3: #{tpu_custom_call.1} parent=1 // loop_header
      %s15 = sphi 0, %s19
      %p16 = scmp.ge.s32.totalorder %s15, 4
      %s25 = sphi 0, %s27
      %s28 = sphi 0, %s25
      %s29 = sphi 0, %s28
      %s45 = sphi 0, %s29
      %s49 = sphi 0, %s49
      %s51 = sphi 0, %s49
      %s52 = sphi 0, %s51
      %s66 = sphi 0, %s52
      %s70 = sphi 0, %s70
      %s72 = sphi 0, %s70
      %s73 = sphi 0, %s72
      %s87 = sphi 0, %s73
      %s91 = sphi 0, %s91
      %s93 = sphi 0, %s91
      %s94 = sphi 0, %s93
      %s108 = sphi 0, %s94
      %s112 = sphi 0, %s112
      %s114 = sphi 0, %s112
      %s115 = sphi 0, %s114
      %s129 = sphi 0, %s115
      %s133 = sphi 0, %s133
      %s135 = sphi 0, %s133
      %s136 = sphi 0, %s135
      %s150 = sphi 0, %s136
      %s154 = sphi 0, %s154
      %s156 = sphi 0, %s154
      %s157 = sphi 0, %s156
      %s171 = sphi 0, %s157
      %s177 = sphi 0, %s179
      %s180 = sphi 0, %s177
      %s181 = sphi 0, %s180
      %s197 = sphi 0, %s181
    $region4: #{tpu_custom_call.1} parent=1 // loop_header_branch
      %18 = sbr.rel (%p16) target = $region8
    $region5: #{tpu_custom_call.1} parent=1 // loop_body
      %s20 = ssub.s32 %s15, 1
      %s21 = ssub.s32 %s15, 2
      %s22 = sadd.s32 %s15, 1
      %s23 = ssub.s32 %s15, %s22
      %p24 = scmp.eq.s32.totalorder %s23, 0
      %s26 = sadd.s32 %s25, 1
      %s27 = scalar_select %p24, %s25, %s26
      %p30 = pneg %p24
      %p31 = scmp.eq.s32.totalorder %s15, 1
      %p32 = por %p30, %p31
      %p33 = scmp.ne.s32.totalorder %s25, %s28
      %p34 = scmp.eq.s32.totalorder %s15, 0
      %p35 = por %p33, %p34
      %p36 = scmp.ne.s32.totalorder %s25, %s28
      %p37 = scmp.eq.s32.totalorder %s20, 1
      %p38 = por %p36, %p37
      %p39 = scmp.ne.s32.totalorder %s28, %s29
      %p40 = scmp.eq.s32.totalorder %s20, 0
      %p41 = por %p39, %p40
      %p42 = scmp.ne.s32.totalorder %s28, %s29
      %p43 = scmp.eq.s32.totalorder %s21, 1
      %p44 = por %p42, %p43
      %p46 = scmp.ne.s32.totalorder %s29, %s45
      %p47 = scmp.eq.s32.totalorder %s21, 0
      %p48 = por %p46, %p47
      %s50 = sadd.s32 %s49, 1
      %p53 = scmp.eq.s32.totalorder %s15, 1
      %p54 = scmp.ne.s32.totalorder %s49, %s51
      %p55 = scmp.eq.s32.totalorder %s15, 0
      %p56 = por %p54, %p55
      %p57 = scmp.ne.s32.totalorder %s49, %s51
      %p58 = scmp.eq.s32.totalorder %s20, 1
      %p59 = por %p57, %p58
      %p60 = scmp.ne.s32.totalorder %s51, %s52
      %p61 = scmp.eq.s32.totalorder %s20, 0
      %p62 = por %p60, %p61
      %p63 = scmp.ne.s32.totalorder %s51, %s52
      %p64 = scmp.eq.s32.totalorder %s21, 1
      %p65 = por %p63, %p64
      %p67 = scmp.ne.s32.totalorder %s52, %s66
      %p68 = scmp.eq.s32.totalorder %s21, 0
      %p69 = por %p67, %p68
      %s71 = sadd.s32 %s70, 1
      %p74 = scmp.eq.s32.totalorder %s15, 1
      %p75 = scmp.ne.s32.totalorder %s70, %s72
      %p76 = scmp.eq.s32.totalorder %s15, 0
      %p77 = por %p75, %p76
      %p78 = scmp.ne.s32.totalorder %s70, %s72
      %p79 = scmp.eq.s32.totalorder %s20, 1
      %p80 = por %p78, %p79
      %p81 = scmp.ne.s32.totalorder %s72, %s73
      %p82 = scmp.eq.s32.totalorder %s20, 0
      %p83 = por %p81, %p82
      %p84 = scmp.ne.s32.totalorder %s72, %s73
      %p85 = scmp.eq.s32.totalorder %s21, 1
      %p86 = por %p84, %p85
      %p88 = scmp.ne.s32.totalorder %s73, %s87
      %p89 = scmp.eq.s32.totalorder %s21, 0
      %p90 = por %p88, %p89
      %s92 = sadd.s32 %s91, 1
      %p95 = scmp.eq.s32.totalorder %s15, 1
      %p96 = scmp.ne.s32.totalorder %s91, %s93
      %p97 = scmp.eq.s32.totalorder %s15, 0
      %p98 = por %p96, %p97
      %p99 = scmp.ne.s32.totalorder %s91, %s93
      %p100 = scmp.eq.s32.totalorder %s20, 1
      %p101 = por %p99, %p100
      %p102 = scmp.ne.s32.totalorder %s93, %s94
      %p103 = scmp.eq.s32.totalorder %s20, 0
      %p104 = por %p102, %p103
      %p105 = scmp.ne.s32.totalorder %s93, %s94
      %p106 = scmp.eq.s32.totalorder %s21, 1
      %p107 = por %p105, %p106
      %p109 = scmp.ne.s32.totalorder %s94, %s108
      %p110 = scmp.eq.s32.totalorder %s21, 0
      %p111 = por %p109, %p110
      %s113 = sadd.s32 %s112, 1
      %p116 = scmp.eq.s32.totalorder %s15, 1
      %p117 = scmp.ne.s32.totalorder %s112, %s114
      %p118 = scmp.eq.s32.totalorder %s15, 0
      %p119 = por %p117, %p118
      %p120 = scmp.ne.s32.totalorder %s112, %s114
      %p121 = scmp.eq.s32.totalorder %s20, 1
      %p122 = por %p120, %p121
      %p123 = scmp.ne.s32.totalorder %s114, %s115
      %p124 = scmp.eq.s32.totalorder %s20, 0
      %p125 = por %p123, %p124
      %p126 = scmp.ne.s32.totalorder %s114, %s115
      %p127 = scmp.eq.s32.totalorder %s21, 1
      %p128 = por %p126, %p127
      %p130 = scmp.ne.s32.totalorder %s115, %s129
      %p131 = scmp.eq.s32.totalorder %s21, 0
      %p132 = por %p130, %p131
      %s134 = sadd.s32 %s133, 1
      %p137 = scmp.eq.s32.totalorder %s15, 1
      %p138 = scmp.ne.s32.totalorder %s133, %s135
      %p139 = scmp.eq.s32.totalorder %s15, 0
      %p140 = por %p138, %p139
      %p141 = scmp.ne.s32.totalorder %s133, %s135
      %p142 = scmp.eq.s32.totalorder %s20, 1
      %p143 = por %p141, %p142
      %p144 = scmp.ne.s32.totalorder %s135, %s136
      %p145 = scmp.eq.s32.totalorder %s20, 0
      %p146 = por %p144, %p145
      %p147 = scmp.ne.s32.totalorder %s135, %s136
      %p148 = scmp.eq.s32.totalorder %s21, 1
      %p149 = por %p147, %p148
      %p151 = scmp.ne.s32.totalorder %s136, %s150
      %p152 = scmp.eq.s32.totalorder %s21, 0
      %p153 = por %p151, %p152
      %s155 = sadd.s32 %s154, 1
      %p158 = scmp.eq.s32.totalorder %s15, 1
      %p159 = scmp.ne.s32.totalorder %s154, %s156
      %p160 = scmp.eq.s32.totalorder %s15, 0
      %p161 = por %p159, %p160
      %p162 = scmp.ne.s32.totalorder %s154, %s156
      %p163 = scmp.eq.s32.totalorder %s20, 1
      %p164 = por %p162, %p163
      %p165 = scmp.ne.s32.totalorder %s156, %s157
      %p166 = scmp.eq.s32.totalorder %s20, 0
      %p167 = por %p165, %p166
      %p168 = scmp.ne.s32.totalorder %s156, %s157
      %p169 = scmp.eq.s32.totalorder %s21, 1
      %p170 = por %p168, %p169
      %p172 = scmp.ne.s32.totalorder %s157, %s171
      %p173 = scmp.eq.s32.totalorder %s21, 0
      %p174 = por %p172, %p173
      %s175 = ssub.s32 %s15, %s22
      %p176 = scmp.eq.s32.totalorder %s175, 0
      %s178 = sadd.s32 %s177, 1
      %s179 = scalar_select %p176, %s177, %s178
      %p182 = pneg %p176
      %p183 = scmp.eq.s32.totalorder %s15, 1
      %p184 = por %p182, %p183
      %p185 = scmp.ne.s32.totalorder %s177, %s180
      %p186 = scmp.eq.s32.totalorder %s15, 0
      %p187 = por %p185, %p186
      %p188 = scmp.ne.s32.totalorder %s177, %s180
      %p189 = scmp.eq.s32.totalorder %s20, 1
      %p190 = por %p188, %p189
      %p191 = scmp.ne.s32.totalorder %s180, %s181
      %p192 = scmp.eq.s32.totalorder %s20, 0
      %p193 = por %p191, %p192
      %p194 = scmp.ne.s32.totalorder %s180, %s181
      %p195 = scmp.eq.s32.totalorder %s21, 1
      %p196 = por %p194, %p195
      %p198 = scmp.ne.s32.totalorder %s181, %s197
      %p199 = scmp.eq.s32.totalorder %s21, 0
      %p200 = por %p198, %p199
      %p201 = scmp.le.s32.totalorder 1, %s15
      %p202 = scmp.lt.s32.totalorder %s15, 3
      %p203 = pnand %p201, %p202
      %p204 = pneg %p203
      // Predicated region
      $region9: #{tpu_custom_call.1} parent=5 // pred_check
        _
      $region10: #{tpu_custom_call.1} parent=5 // pred_check_branch
        %206 = sbr.rel (%p203) target = $region12
      $region11: #{tpu_custom_call.1} parent=5 // pred_region
        %s207 = ssub.s32 %s15, 1
        // Predicated region
        $region13: #{tpu_custom_call.1} parent=11 // pred_check
          %p208 = pneg %p62
        $region14: #{tpu_custom_call.1} parent=11 // pred_check_branch
          %210 = sbr.rel (%p208) target = $region16
        $region15: #{tpu_custom_call.1} parent=11 // pred_region
          %s212 = ssub.s32 256, 256
          %213 = vsyncadd [#allocation3], %s212
          %s214 = sshll.u32 [#allocation2], 4
          %s215 = int_to_ptr.vmem [resolvable:$true] %s214
          %220 = dma.hbm_to_vmem [thread:$0]  %s1, 256, %s215, [#allocation3], 64, 64, 4
        $region16: #{tpu_custom_call.1} parent=11 // pred_fallthru
          _
        // Predicated region
        $region17: #{tpu_custom_call.1} parent=11 // pred_check
          %p221 = pneg %p83
        $region18: #{tpu_custom_call.1} parent=11 // pred_check_branch
          %223 = sbr.rel (%p221) target = $region20
        $region19: #{tpu_custom_call.1} parent=11 // pred_region
          _
        $region20: #{tpu_custom_call.1} parent=11 // pred_fallthru
          _
        // Predicated region
        $region21: #{tpu_custom_call.1} parent=11 // pred_check
          %p224 = pneg %p104
        $region22: #{tpu_custom_call.1} parent=11 // pred_check_branch
          %226 = sbr.rel (%p224) target = $region24
        $region23: #{tpu_custom_call.1} parent=11 // pred_region
          %s228 = ssub.s32 256, 256
          %229 = vsyncadd [#allocation5], %s228
          %s230 = sshll.u32 [#allocation4], 4
          %s231 = int_to_ptr.vmem [resolvable:$true] %s230
          %236 = dma.hbm_to_vmem [thread:$0]  %s3, 256, %s231, [#allocation5], 64, 64, 4
        $region24: #{tpu_custom_call.1} parent=11 // pred_fallthru
          _
        // Predicated region
        $region25: #{tpu_custom_call.1} parent=11 // pred_check
          %p237 = pneg %p125
        $region26: #{tpu_custom_call.1} parent=11 // pred_check_branch
          %239 = sbr.rel (%p237) target = $region28
        $region27: #{tpu_custom_call.1} parent=11 // pred_region
          _
        $region28: #{tpu_custom_call.1} parent=11 // pred_fallthru
          _
        // Predicated region
        $region29: #{tpu_custom_call.1} parent=11 // pred_check
          %p240 = pneg %p146
        $region30: #{tpu_custom_call.1} parent=11 // pred_check_branch
          %242 = sbr.rel (%p240) target = $region32
        $region31: #{tpu_custom_call.1} parent=11 // pred_region
          _
        $region32: #{tpu_custom_call.1} parent=11 // pred_fallthru
          _
        // Predicated region
        $region33: #{tpu_custom_call.1} parent=11 // pred_check
          %p243 = pneg %p167
        $region34: #{tpu_custom_call.1} parent=11 // pred_check_branch
          %245 = sbr.rel (%p243) target = $region36
        $region35: #{tpu_custom_call.1} parent=11 // pred_region
          _
        $region36: #{tpu_custom_call.1} parent=11 // pred_fallthru
          _
      $region12: #{tpu_custom_call.1} parent=5 // pred_fallthru
        _
      %p246 = scmp.lt.s32.totalorder %s15, 2
      // Predicated region
      $region37: #{tpu_custom_call.1} parent=5 // pred_check
        %p247 = pneg %p246
      $region38: #{tpu_custom_call.1} parent=5 // pred_check_branch
        %249 = sbr.rel (%p247) target = $region40
      $region39: #{tpu_custom_call.1} parent=5 // pred_region
        // Predicated region
        $region41: #{tpu_custom_call.1} parent=39 // pred_check
          %p250 = pneg %p35
        $region42: #{tpu_custom_call.1} parent=39 // pred_check_branch
          %252 = sbr.rel (%p250) target = $region44
        $region43: #{tpu_custom_call.1} parent=39 // pred_region
          %p253 = scmp.lt.s32.totalorder %s15, 1
          %s254 = scalar_select %p253, %s15, 1
          %s255 = smul.addr %s254, 8
          %s256 = scalar_lea.vmem %s0, %s255
        $region44: #{tpu_custom_call.1} parent=39 // pred_fallthru
          _
      $region40: #{tpu_custom_call.1} parent=5 // pred_fallthru
        _
      %p257 = scmp.le.s32.totalorder 1, %s15
      %p258 = scmp.lt.s32.totalorder %s15, 3
      %p259 = pnand %p257, %p258
      %p260 = pneg %p259
      // Predicated region
      $region45: #{tpu_custom_call.1} parent=5 // pred_check
        _
      $region46: #{tpu_custom_call.1} parent=5 // pred_check_branch
        %262 = sbr.rel (%p259) target = $region48
      $region47: #{tpu_custom_call.1} parent=5 // pred_region
        %s263 = ssub.s32 %s15, 1
        // Predicated region
        $region49: #{tpu_custom_call.1} parent=47 // pred_check
          %p264 = pneg %p62
        $region50: #{tpu_custom_call.1} parent=47 // pred_check_branch
          %266 = sbr.rel (%p264) target = $region52
        $region51: #{tpu_custom_call.1} parent=47 // pred_region
          %267 = dma.done [#allocation3], 256
        $region52: #{tpu_custom_call.1} parent=47 // pred_fallthru
          _
        // Predicated region
        $region53: #{tpu_custom_call.1} parent=47 // pred_check
          %p268 = pneg %p104
        $region54: #{tpu_custom_call.1} parent=47 // pred_check_branch
          %270 = sbr.rel (%p268) target = $region56
        $region55: #{tpu_custom_call.1} parent=47 // pred_region
          %271 = dma.done [#allocation5], 256
        $region56: #{tpu_custom_call.1} parent=47 // pred_fallthru
          _
        %p272 = scmp.lt.s32.totalorder %s20, 1
        %s273 = scalar_select %p272, %s20, 1
        %s274 = smul.addr %s273, 8
        %s275 = scalar_lea.vmem %s0, %s274
        %p276 = pneg %p41
        %p277 = pneg %p38
        %p278 = pneg %p62
        %p279 = pneg %p59
        %p280 = pneg %p83
        %p281 = pneg %p80
        %p282 = pneg %p104
        %p283 = pneg %p101
        %p284 = pneg %p125
        %p285 = pneg %p122
        %p286 = pneg %p146
        %p287 = pneg %p143
        %p288 = pneg %p167
        %p289 = pneg %p164
        %p290 = pneg %p193
        %p291 = pneg %p190
        %p292 = scmp.lt.s32.totalorder %s20, 1
        %s293 = scalar_select %p292, %s20, 1
        %s294 = smul.addr %s293, 8
        %s295 = scalar_lea.vmem %s7, %s294
        %p296 = scmp.lt.s32.totalorder %s20, 1
        %s297 = scalar_select %p296, %s20, 1
        %s298 = smul.addr %s297, 8
        %s299 = scalar_lea.vmem %s0, %s298
        %p300 = scmp.lt.s32.totalorder %s20, 1
        %s301 = scalar_select %p300, %s20, 1
        %s302 = smul.addr %s301, 8
        %s303 = scalar_lea.vmem %s7, %s302
        %v305 = vld [vmem:[%s299] sm:$0xff]
        %v306 = vpack.c.bf16 %v305, %v305
        %v307 = vld [vmem:[#allocation2] sm:$0xf]
        %v308 = vld [vmem:[#allocation2 + $0x4] sm:$0xf]
        %v309 = vld [vmem:[#allocation2 + $0x8] sm:$0xf]
        %v310 = vld [vmem:[#allocation2 + $0xc] sm:$0xf]
        %v311 = vld [vmem:[%s2] sm:$0x1]
        %v313 = vlaneseq
        %v314 = vshrl.u32 %v313, 7
        %v315 = vsub.s32 0, %v314
        %v316 = vrot.slane %v311, %v315
        %v322 = vunpack.c.l.b16 %v307
        %v323 = vunpack.c.l.b16 %v308
        %v324 = vunpack.c.l.b16 %v309
        %v325 = vunpack.c.l.b16 %v310
        %v326 = vpack.c.b16 %v323, %v322
        %v327 = vpack.c.b16 %v325, %v324
        %vm330 = vcmask 261120
        %v332 = vsel %vm330, %v306, 0
        %334 = vmatprep.subr.bf16.mxu0 0
        %335 = vmatpush1.bf16.msra.mxu0 %v326
        %336 = vmatprep.subr.bf16.mxu0 0
        %337 = vmatpush1.bf16.msra.mxu0 %v327
        %338 = vmatprep.subr.bf16.mxu0 0
        %339 = vmatpush1.bf16.msra.mxu0 0
        %340 = vmatprep.subr.bf16.mxu0 0
        %341 = vmatpush1.bf16.msra.mxu0 0
        %342 = vmatprep.subr.bf16.mxu0 0
        %343 = vmatpush1.bf16.msra.mxu0 0
        %344 = vmatprep.subr.bf16.mxu0 0
        %345 = vmatpush1.bf16.msra.mxu0 0
        %346 = vmatprep.subr.bf16.mxu0 0
        %347 = vmatpush1.bf16.msra.mxu0 0
        %348 = vmatprep.subr.bf16.mxu0 0
        %349 = vmatpush1.bf16.msra.mxu0 0
        %350 = vmatprep.subr.bf16.mxu0 0
        %351 = vmatpush1.bf16.msra.mxu0 0
        %352 = vmatprep.subr.bf16.mxu0 0
        %353 = vmatpush1.bf16.msra.mxu0 0
        %354 = vmatprep.subr.bf16.mxu0 0
        %355 = vmatpush1.bf16.msra.mxu0 0
        %356 = vmatprep.subr.bf16.mxu0 0
        %357 = vmatpush1.bf16.msra.mxu0 0
        %358 = vmatprep.subr.bf16.mxu0 0
        %359 = vmatpush1.bf16.msra.mxu0 0
        %360 = vmatprep.subr.bf16.mxu0 0
        %361 = vmatpush1.bf16.msra.mxu0 0
        %362 = vmatprep.subr.bf16.mxu0 0
        %363 = vmatpush1.bf16.msra.mxu0 0
        %364 = vmatprep.subr.bf16.mxu0 0
        %365 = vmatpush1.bf16.msra.mxu0 0
        %366 = vmatprep.mubr.bf16.mxu0 0
        %367 = vmatmul.mubr.bf16.gmra.mrb[0].mxu0 %v332
        %v368 = vpop.f32.mrb[0].mxu0
        %v369 = vadd.f32 %v316, %v368
        %v370 = vpop.f32.mrb[0].mxu0
        %v371 = vpop.f32.mrb[0].mxu0
        %v372 = vpop.f32.mrb[0].mxu0
        %373 = vdwg.mxu0
        %v374 = vmax.f32 %v369, 0.0
        %v375 = vpack.c.bf16 %v374, %v374
        %v376 = vld [vmem:[#allocation4] sm:$0xf]
        %v377 = vld [vmem:[#allocation4 + $0x4] sm:$0xf]
        %v378 = vld [vmem:[#allocation4 + $0x8] sm:$0xf]
        %v379 = vld [vmem:[#allocation4 + $0xc] sm:$0xf]
        %v380 = vld [vmem:[%s4] sm:$0x1]
        %v382 = vlaneseq
        %v383 = vshrl.u32 %v382, 7
        %v384 = vsub.s32 0, %v383
        %v385 = vrot.slane %v380, %v384
        %v391 = vunpack.c.l.b16 %v376
        %v392 = vunpack.c.l.b16 %v377
        %v393 = vunpack.c.l.b16 %v378
        %v394 = vunpack.c.l.b16 %v379
        %v395 = vpack.c.b16 %v392, %v391
        %v396 = vpack.c.b16 %v394, %v393
        %v400 = vsel %vm330, %v375, 0
        %402 = vmatprep.subr.bf16.mxu0 0
        %403 = vmatpush1.bf16.msra.mxu0 %v395
        %404 = vmatprep.subr.bf16.mxu0 0
        %405 = vmatpush1.bf16.msra.mxu0 %v396
        %406 = vmatprep.subr.bf16.mxu0 0
        %407 = vmatpush1.bf16.msra.mxu0 0
        %408 = vmatprep.subr.bf16.mxu0 0
        %409 = vmatpush1.bf16.msra.mxu0 0
        %410 = vmatprep.subr.bf16.mxu0 0
        %411 = vmatpush1.bf16.msra.mxu0 0
        %412 = vmatprep.subr.bf16.mxu0 0
        %413 = vmatpush1.bf16.msra.mxu0 0
        %414 = vmatprep.subr.bf16.mxu0 0
        %415 = vmatpush1.bf16.msra.mxu0 0
        %416 = vmatprep.subr.bf16.mxu0 0
        %417 = vmatpush1.bf16.msra.mxu0 0
        %418 = vmatprep.subr.bf16.mxu0 0
        %419 = vmatpush1.bf16.msra.mxu0 0
        %420 = vmatprep.subr.bf16.mxu0 0
        %421 = vmatpush1.bf16.msra.mxu0 0
        %422 = vmatprep.subr.bf16.mxu0 0
        %423 = vmatpush1.bf16.msra.mxu0 0
        %424 = vmatprep.subr.bf16.mxu0 0
        %425 = vmatpush1.bf16.msra.mxu0 0
        %426 = vmatprep.subr.bf16.mxu0 0
        %427 = vmatpush1.bf16.msra.mxu0 0
        %428 = vmatprep.subr.bf16.mxu0 0
        %429 = vmatpush1.bf16.msra.mxu0 0
        %430 = vmatprep.subr.bf16.mxu0 0
        %431 = vmatpush1.bf16.msra.mxu0 0
        %432 = vmatprep.subr.bf16.mxu0 0
        %433 = vmatpush1.bf16.msra.mxu0 0
        %434 = vmatprep.mubr.bf16.mxu0 0
        %435 = vmatmul.mubr.bf16.gmra.mrb[0].mxu0 %v400
        %v436 = vpop.f32.mrb[0].mxu0
        %v437 = vadd.f32 %v385, %v436
        %v438 = vpop.f32.mrb[0].mxu0
        %v439 = vpop.f32.mrb[0].mxu0
        %v440 = vpop.f32.mrb[0].mxu0
        %441 = vdwg.mxu0
        %v442 = vmax.f32 %v437, 0.0
        %v443 = vpack.c.bf16 %v442, %v442
        %v444 = vld [vmem:[%s5] sm:$0xf]
        %v445 = vld [vmem:[%s5 + $0x4] sm:$0xf]
        %v446 = vld [vmem:[%s5 + $0x8] sm:$0xf]
        %v447 = vld [vmem:[%s5 + $0xc] sm:$0xf]
        %v448 = vld [vmem:[%s6] sm:$0x1]
        %v450 = vlaneseq
        %v451 = vshrl.u32 %v450, 7
        %v452 = vsub.s32 0, %v451
        %v453 = vrot.slane %v448, %v452
        %v459 = vunpack.c.l.b16 %v444
        %v460 = vunpack.c.l.b16 %v445
        %v461 = vunpack.c.l.b16 %v446
        %v462 = vunpack.c.l.b16 %v447
        %v463 = vpack.c.b16 %v460, %v459
        %v464 = vpack.c.b16 %v462, %v461
        %v468 = vsel %vm330, %v443, 0
        %470 = vmatprep.subr.bf16.mxu0 0
        %471 = vmatpush1.bf16.msra.mxu0 %v463
        %472 = vmatprep.subr.bf16.mxu0 0
        %473 = vmatpush1.bf16.msra.mxu0 %v464
        %474 = vmatprep.subr.bf16.mxu0 0
        %475 = vmatpush1.bf16.msra.mxu0 0
        %476 = vmatprep.subr.bf16.mxu0 0
        %477 = vmatpush1.bf16.msra.mxu0 0
        %478 = vmatprep.subr.bf16.mxu0 0
        %479 = vmatpush1.bf16.msra.mxu0 0
        %480 = vmatprep.subr.bf16.mxu0 0
        %481 = vmatpush1.bf16.msra.mxu0 0
        %482 = vmatprep.subr.bf16.mxu0 0
        %483 = vmatpush1.bf16.msra.mxu0 0
        %484 = vmatprep.subr.bf16.mxu0 0
        %485 = vmatpush1.bf16.msra.mxu0 0
        %486 = vmatprep.subr.bf16.mxu0 0
        %487 = vmatpush1.bf16.msra.mxu0 0
        %488 = vmatprep.subr.bf16.mxu0 0
        %489 = vmatpush1.bf16.msra.mxu0 0
        %490 = vmatprep.subr.bf16.mxu0 0
        %491 = vmatpush1.bf16.msra.mxu0 0
        %492 = vmatprep.subr.bf16.mxu0 0
        %493 = vmatpush1.bf16.msra.mxu0 0
        %494 = vmatprep.subr.bf16.mxu0 0
        %495 = vmatpush1.bf16.msra.mxu0 0
        %496 = vmatprep.subr.bf16.mxu0 0
        %497 = vmatpush1.bf16.msra.mxu0 0
        %498 = vmatprep.subr.bf16.mxu0 0
        %499 = vmatpush1.bf16.msra.mxu0 0
        %500 = vmatprep.subr.bf16.mxu0 0
        %501 = vmatpush1.bf16.msra.mxu0 0
        %502 = vmatprep.mubr.bf16.mxu0 0
        %503 = vmatmul.mubr.bf16.gmra.mrb[0].mxu0 %v468
        %v504 = vpop.f32.mrb[0].mxu0
        %v505 = vadd.f32 %v453, %v504
        %v506 = vpop.f32.mrb[0].mxu0
        %v507 = vpop.f32.mrb[0].mxu0
        %v508 = vpop.f32.mrb[0].mxu0
        %509 = vdwg.mxu0
        %vm510 = vcmask 31744
        %511 = vst.msk [vmem:[%s303] sm:$0xff] %vm510, %v505
        %p512 = scmp.lt.s32.totalorder %s20, 1
        %s513 = scalar_select %p512, %s20, 1
        %s514 = smul.addr %s513, 8
        %s515 = scalar_lea.vmem %s7, %s514
        // Predicated region
        $region57: #{tpu_custom_call.1} parent=47 // pred_check
          %p516 = pneg %p190
        $region58: #{tpu_custom_call.1} parent=47 // pred_check_branch
          %518 = sbr.rel (%p516) target = $region60
        $region59: #{tpu_custom_call.1} parent=47 // pred_region
          _
        $region60: #{tpu_custom_call.1} parent=47 // pred_fallthru
          _
      $region48: #{tpu_custom_call.1} parent=5 // pred_fallthru
        _
      %p519 = scmp.le.s32.totalorder 2, %s15
      // Predicated region
      $region61: #{tpu_custom_call.1} parent=5 // pred_check
        %p520 = pneg %p519
      $region62: #{tpu_custom_call.1} parent=5 // pred_check_branch
        %522 = sbr.rel (%p520) target = $region64
      $region63: #{tpu_custom_call.1} parent=5 // pred_region
        %s523 = ssub.s32 %s15, 2
        // Predicated region
        $region65: #{tpu_custom_call.1} parent=63 // pred_check
          %p524 = pneg %p196
        $region66: #{tpu_custom_call.1} parent=63 // pred_check_branch
          %526 = sbr.rel (%p524) target = $region68
        $region67: #{tpu_custom_call.1} parent=63 // pred_region
          %p527 = scmp.lt.s32.totalorder %s21, 1
          %s528 = scalar_select %p527, %s21, 1
          %s529 = smul.addr %s528, 8
          %s530 = scalar_lea.vmem %s7, %s529
        $region68: #{tpu_custom_call.1} parent=63 // pred_fallthru
          _
      $region64: #{tpu_custom_call.1} parent=5 // pred_fallthru
        _
    $region6: #{tpu_custom_call.1} parent=1 // loop_footer
      %s19 = sadd.s32 1, %s15
    $region7: #{tpu_custom_call.1} parent=1 // loop_footer_branch
      %14 = sbr.rel target = $region3
    $region8: #{tpu_custom_call.1} parent=1 // loop_exit
      _
    %531 = vsyncpa [#allocation3], 1
    %s532 = scalar_lea.sflag [#allocation3], 1
    %533 = vsyncpa %s532, 1
    %534 = vsyncpa [#allocation5], 1

</llo_original>
